<compile_context>
chip_gen: v7x
topology: tpu7x:2x2x1
jax: 0.10.0
libtpu: 0.0.40
codegen_flags: <defaults>
</compile_context>

<pallas_src>
import math
from functools import partial

import numpy as np
import jax
import jax.numpy as jnp
from jax.experimental import pallas as pl
from jax.experimental.pallas import tpu as pltpu


# ---------------------------------------------------------------------------- kernel
def _thnn_kernel(emb_ref, w_ref, g_ref, out_ref, *, F, R, HD, O, GN, GEP, eps):
    RHD = R + HD

    # ---- static slices of the packed weight slab (all Linears stored transposed) ----
    WfT = w_ref[0:RHD, 0:F]                        # [R+Hd, F]  fused p_network | p2_network[0]
    bfT = w_ref[0:RHD, F:F + 1]                    # [R+Hd, 1]  (ones-column already folded in)
    W2bT = w_ref[RHD:RHD + O, 0:HD]                # [O, Hd]
    WqT = w_ref[RHD + O:RHD + 2 * O, 0:R]          # [O, R]
    bqT = w_ref[RHD + O:RHD + 2 * O, R:R + 1]      # [O, 1]
    b2bT = w_ref[RHD + 2 * O:RHD + 3 * O, 0:1]     # [O, 1]

    # ---- static slices of the packed graph-constant slab ----
    Hbd = g_ref[0:GN, 0:GEP]                       # [GN, GEp] block-diag incidence (dummy cols = 0)
    Htbd = g_ref[GN:GN + GEP, 0:GN]                # [GEp, GN] its transpose (dummy rows = 0)
    c = g_ref[GN + GEP:GN + GEP + 1, 0:GEP]        # [1, GEp]  per-edge 1/(k-1)! * prod deg^(1/k)
    inv_deg = g_ref[GN + GEP + 1:GN + GEP + 2, 0:GN]   # [1, GN] exact 1/deg (host-precomputed)

    embT = emb_ref[...]                            # [F, GN]

    # Stage 1: fused [p_network | p2_network[0]] matmul, then p2_network[3].
    zT = jnp.dot(WfT, embT, preferred_element_type=jnp.float32) + bfT           # [R+Hd, GN]
    e_newT = zT[0:R, :]                            # [R, GN]  (Dropout -> identity)
    h1T = jnp.maximum(zT[R:RHD, :], 0.0)           # [Hd, GN] ReLU
    e_new2T = jnp.dot(W2bT, h1T, preferred_element_type=jnp.float32) + b2bT     # [O, GN]

    # Leave-one-out signed product over edge members, log domain (sign via parity).
    e_clT = jnp.where(jnp.abs(e_newT) < eps, eps, e_newT)                        # [R, GN]
    logabsT = jnp.log(jnp.abs(e_clT))
    negT = jnp.where(e_clT < 0.0, 1.0, 0.0)

    # ONE MXU contraction for all per-edge statistics (edge_sum2 | sum log | #neg).
    XT = jnp.concatenate([e_new2T, logabsT, negT], axis=0)                       # [O+2R, GN]
    edge_statsT = jnp.dot(XT, Hbd, preferred_element_type=jnp.float32)           # [O+2R, GEp]
    edge_sum2T = edge_statsT[0:O, :]
    slogT = edge_statsT[O:O + R, :]
    snegT = edge_statsT[O + R:O + 2 * R, :]

    parity = snegT - 2.0 * jnp.floor(snegT * 0.5)                                # 0/1
    p_fullT = jnp.exp(slogT) * (1.0 - 2.0 * parity)                              # [R, GEp] signed prod

    # ONE MXU contraction back to nodes (relu-sum | c-scaled full products).
    YT = jnp.concatenate([jnp.maximum(edge_sum2T, 0.0), p_fullT * c], axis=0)    # [O+R, GEp]
    node_statsT = jnp.dot(YT, Htbd, preferred_element_type=jnp.float32)          # [O+R, GN]
    relu_sumT = node_statsT[0:O, :]
    node_emb_sumT = node_statsT[O:O + R, :] / e_clT   # exact leave-one-out by division

    # q_network + mean over incident edges + final ReLU:
    # (q_sum + deg*bq + relu_sum)/deg == (q_sum + relu_sum)*inv_deg + bq
    q_sumT = jnp.dot(WqT, node_emb_sumT, preferred_element_type=jnp.float32)     # [O, GN]
    out_ref[...] = jnp.maximum((q_sumT + relu_sumT) * inv_deg + bqT, 0.0)


# ------------------------------------------------------------------- host-side packing
def build_weight_slab(Wp, bp, W2a, b2a, W2b, b2b, Wq, bq):
    """Pack every Linear (transposed) into one slab. Fuses the two first-stage Linears and
    folds the ones-column into the fused bias. Done ONCE per model, not per forward."""
    Wp, bp, W2a, b2a = map(np.asarray, (Wp, bp, W2a, b2a))
    W2b, b2b, Wq, bq = map(np.asarray, (W2b, b2b, Wq, bq))
    F1, R = Wp.shape
    HD = W2a.shape[1]
    O = W2b.shape[1]
    F = F1 - 1
    RHD = R + HD

    Wf = np.concatenate([Wp, W2a], axis=1)                      # [F+1, R+Hd]
    bf = np.concatenate([bp, b2a], axis=1) + Wf[F:F + 1, :]     # fold ones-column row into bias
    Wf = Wf[:F, :]                                              # [F, R+Hd]

    LW = max(F + 1, HD, R + 1)
    slab = np.zeros((RHD + 3 * O, LW), np.float32)
    slab[0:RHD, 0:F] = Wf.T
    slab[0:RHD, F:F + 1] = bf.T
    slab[RHD:RHD + O, 0:HD] = W2b.T
    slab[RHD + O:RHD + 2 * O, 0:R] = Wq.T
    slab[RHD + O:RHD + 2 * O, R:R + 1] = bq.T
    slab[RHD + 2 * O:RHD + 3 * O, 0:1] = b2b.T
    return jnp.asarray(slab)


def build_graph_slab(Hnp, G):
    """Per-hypergraph constants, tiled block-diagonally for G graph copies per grid block.
    Done ONCE per hypergraph. Edge axis is padded to a multiple of 128 with zero (dummy)
    edges so every kernel intermediate stays lane-dense."""
    N, E = Hnp.shape
    GN, GE = G * N, G * E
    GEP = ((GE + 127) // 128) * 128

    deg = Hnp.sum(axis=1).astype(np.float64)                    # [N] node degree (>= 1 assumed)
    ksz = Hnp.sum(axis=0).astype(np.float64)                    # [E] nodes per edge
    pw = deg[:, None] ** (1.0 / ksz[None, :])
    pwprod = np.prod(np.where(Hnp > 0.5, pw, 1.0), axis=0)      # [E] prod_m deg(m)^(1/k)
    coef = np.array([1.0 / math.factorial(int(k) - 1) for k in ksz])
    c = coef * pwprod                                           # [E] per-edge scalar (A = H * c)

    Hbd = np.zeros((GN, GEP), np.float32)
    for g in range(G):
        Hbd[g * N:(g + 1) * N, g * E:(g + 1) * E] = Hnp
    c_row = np.zeros((GEP,), np.float32)
    c_row[:GE] = np.tile(c, G)
    inv_deg_row = np.tile(1.0 / deg, G).astype(np.float32)      # exact reciprocal, host-side

    rows = GN + GEP + 2
    rows_pad = ((rows + 7) // 8) * 8
    slab = np.zeros((rows_pad, max(GN, GEP)), np.float32)
    slab[0:GN, 0:GEP] = Hbd
    slab[GN:GN + GEP, 0:GN] = Hbd.T
    slab[GN + GEP, 0:GEP] = c_row
    slab[GN + GEP + 1, 0:GN] = inv_deg_row
    return jnp.asarray(slab), GEP


# --------------------------------------------------------------------------- wrapper
def build_thnn_forward(F, HD, O, R, N, G, GEP):
    GN = G * N
    assert GN % 128 == 0, "graphs-per-block must make G*N a multiple of 128"
    kernel = partial(_thnn_kernel, F=F, R=R, HD=HD, O=O, GN=GN, GEP=GEP, eps=1e-20)

    @jax.jit
    def forward(emb, w_slab, g_slab):
        # emb: [B, N, F] -> out: [B, N, O]
        B = emb.shape[0]
        assert (B * N) % GN == 0, "batch must be a multiple of graphs-per-block"
        nb = (B * N) // GN
        # lane axis = (graph, node): layout plumbing for lane-dense kernel blocks
        embT = jnp.transpose(emb, (2, 0, 1)).reshape(F, B * N)
        outT = pl.pallas_call(
            kernel,
            out_shape=jax.ShapeDtypeStruct((O, B * N), jnp.float32),
            grid=(nb,),
            in_specs=[
                pl.BlockSpec((F, GN), lambda i: (0, i)),        # streamed per grid step
                pl.BlockSpec(w_slab.shape, lambda i: (0, 0)),   # constant block -> DMA'd once
                pl.BlockSpec(g_slab.shape, lambda i: (0, 0)),   # constant block -> DMA'd once
            ],
            out_specs=pl.BlockSpec((O, GN), lambda i: (0, i)),  # lane-dense [O,128] stores
            compiler_params=pltpu.CompilerParams(
                dimension_semantics=("parallel",)),             # v7x: split steps across 2 TCs
        )(embT, w_slab, g_slab)
        return jnp.transpose(outT.reshape(O, B, N), (1, 2, 0))

    return forward


# -------------------------------------------------------------------------- reference
def ref_forward(Hnp, emb_np, Wp, bp, W2a, b2a, W2b, b2b, Wq, bq):
    """Pure numpy reference mirroring the PyTorch per-node / per-edge loops (one graph)."""
    N = emb_np.shape[0]
    emb_aug = np.concatenate([emb_np, np.ones((N, 1))], axis=1)
    e_new = emb_aug @ Wp + bp
    h1 = np.maximum(emb_aug @ W2a + b2a, 0.0)
    e_new2 = h1 @ W2b + b2b
    node_edges = [np.argwhere(Hnp[i] == 1).reshape(-1) for i in range(N)]
    edge_nodes = [np.argwhere(Hnp[:, j] == 1).reshape(-1) for j in range(Hnp.shape[1])]
    R = e_new.shape[1]
    outs = []
    for n in range(N):
        emb_stack, emb2_stack = [], []
        for e in node_edges[n]:
            edge_emb = np.ones(R)
            edge_emb2 = np.zeros(e_new2.shape[1])
            k = len(edge_nodes[e])
            for m in edge_nodes[e]:
                if int(n) != m:
                    num = len(node_edges[m]) ** (1.0 / k)
                    edge_emb = edge_emb * (num * e_new[m])
                edge_emb2 = edge_emb2 + e_new2[m]
            num = len(node_edges[n]) ** (1.0 / k)
            emb_stack.append((1.0 / math.factorial(k - 1)) * num * edge_emb)
            emb2_stack.append(edge_emb2)
        emb_stack = np.stack(emb_stack)
        emb2_stack = np.stack(emb2_stack)
        q = emb_stack @ Wq + bq
        outs.append((q + np.maximum(emb2_stack, 0.0)).mean(axis=0))
    return np.maximum(np.stack(outs), 0.0)


# ------------------------------------------------------------------------------ main
if __name__ == "__main__":
    N, E = 8, 6
    featdim, hiddendim, outputdim, rank = 16, 32, 8, 16
    F1 = featdim + 1
    B = 64          # batched embedding samples over the same hypergraph
    G = 16          # graph copies per grid block -> G*N = 128 lanes, grid = B//G = 4 steps

    # deterministic hypergraph incidence matrix (every node in >= 1 edge)
    edges = [(0, 1, 2), (2, 3), (3, 4, 5), (5, 6, 7, 0), (1, 4, 6), (2, 5, 7)]
    Hnp = np.zeros((N, E), dtype=np.float32)
    for j, e in enumerate(edges):
        for n in e:
            Hnp[n, j] = 1.0

    key = jax.random.PRNGKey(0)
    keys = jax.random.split(key, 8)

    def uinit(k, shape, fan_in):
        b = 1.0 / math.sqrt(fan_in)
        return jax.random.uniform(k, shape, jnp.float32, -b, b)

    # p_network init per module: weight ~ N(0, sqrt(1/(featdim+1))), bias = 0
    Wp = (jax.random.normal(keys[0], (F1, rank)) * math.sqrt(1.0 / F1)).astype(jnp.float32)
    bp = jnp.zeros((1, rank), jnp.float32)
    # remaining Linears: PyTorch default uniform init
    W2a = uinit(keys[1], (F1, hiddendim), F1)
    b2a = uinit(keys[2], (1, hiddendim), F1)
    W2b = uinit(keys[3], (hiddendim, outputdim), hiddendim)
    b2b = uinit(keys[4], (1, outputdim), hiddendim)
    Wq = uinit(keys[5], (rank, outputdim), rank)
    bq = uinit(keys[6], (1, outputdim), rank)
    emb = jax.random.normal(keys[7], (B, N, featdim), jnp.float32)

    # one-time packing (per model / per hypergraph, not per forward)
    w_slab = build_weight_slab(Wp, bp, W2a, b2a, W2b, b2b, Wq, bq)
    g_slab, GEP = build_graph_slab(Hnp, G)

    forward = build_thnn_forward(featdim, hiddendim, outputdim, rank, N, G, GEP)
    out = jax.block_until_ready(forward(emb, w_slab, g_slab))

    # float64 reference, per batch element
    ref = np.stack([
        ref_forward(Hnp, np.asarray(emb[b], np.float64),
                    np.asarray(Wp, np.float64), np.asarray(bp, np.float64),
                    np.asarray(W2a, np.float64), np.asarray(b2a, np.float64),
                    np.asarray(W2b, np.float64), np.asarray(b2b, np.float64),
                    np.asarray(Wq, np.float64), np.asarray(bq, np.float64))
        for b in range(B)])

    assert out.shape == (B, N, outputdim)
    assert np.allclose(np.asarray(out), ref, rtol=5e-2, atol=5e-2), "kernel != reference"
    print("KERNEL_OK")
</pallas_src>

<mosaic_0001>
module attributes {stable_mosaic.version = 11 : i64} {
  func.func @_thnn_kernel(%arg0: i32, %arg1: memref<16x128xf32, #tpu.memory_space<vmem>>, %arg2: memref<72x32xf32, #tpu.memory_space<vmem>>, %arg3: memref<264x128xf32, #tpu.memory_space<vmem>>, %arg4: memref<8x128xf32, #tpu.memory_space<vmem>>) attributes {dimension_semantics = [#tpu.dimension_semantics<parallel>], iteration_bounds = array<i64: 4>, scalar_prefetch = 0 : i64, scratch_operands = 0 : i64, tpu.core_type = #tpu.core_type<tc>, window_params = [{transform_indices = @transform_0, window_bounds = array<i64: 16, 128>}, {pipeline_mode = #tpu.pipeline_mode<synchronous>, transform_indices = @transform_1, window_bounds = array<i64: 72, 32>}, {pipeline_mode = #tpu.pipeline_mode<synchronous>, transform_indices = @transform_2, window_bounds = array<i64: 264, 128>}, {transform_indices = @transform_3, window_bounds = array<i64: 8, 128>}]} {
    %c0 = arith.constant 0 : index
    %c0_0 = arith.constant 0 : index
    %0 = vector.load %arg2[%c0, %c0_0] : memref<72x32xf32, #tpu.memory_space<vmem>>, vector<48x16xf32>
    %c0_1 = arith.constant 0 : index
    %c16 = arith.constant 16 : index
    %1 = vector.load %arg2[%c0_1, %c16] : memref<72x32xf32, #tpu.memory_space<vmem>>, vector<48x1xf32>
    %c48 = arith.constant 48 : index
    %c0_2 = arith.constant 0 : index
    %2 = vector.load %arg2[%c48, %c0_2] : memref<72x32xf32, #tpu.memory_space<vmem>>, vector<8x32xf32>
    %c56 = arith.constant 56 : index
    %c0_3 = arith.constant 0 : index
    %3 = vector.load %arg2[%c56, %c0_3] : memref<72x32xf32, #tpu.memory_space<vmem>>, vector<8x16xf32>
    %c56_4 = arith.constant 56 : index
    %c16_5 = arith.constant 16 : index
    %4 = vector.load %arg2[%c56_4, %c16_5] : memref<72x32xf32, #tpu.memory_space<vmem>>, vector<8x1xf32>
    %c64 = arith.constant 64 : index
    %c0_6 = arith.constant 0 : index
    %5 = vector.load %arg2[%c64, %c0_6] : memref<72x32xf32, #tpu.memory_space<vmem>>, vector<8x1xf32>
    %c0_7 = arith.constant 0 : index
    %c0_8 = arith.constant 0 : index
    %6 = vector.load %arg3[%c0_7, %c0_8] : memref<264x128xf32, #tpu.memory_space<vmem>>, vector<128x128xf32>
    %c128 = arith.constant 128 : index
    %c0_9 = arith.constant 0 : index
    %7 = vector.load %arg3[%c128, %c0_9] : memref<264x128xf32, #tpu.memory_space<vmem>>, vector<128x128xf32>
    %c256 = arith.constant 256 : index
    %c0_10 = arith.constant 0 : index
    %8 = vector.load %arg3[%c256, %c0_10] : memref<264x128xf32, #tpu.memory_space<vmem>>, vector<1x128xf32>
    %c257 = arith.constant 257 : index
    %c0_11 = arith.constant 0 : index
    %9 = vector.load %arg3[%c257, %c0_11] : memref<264x128xf32, #tpu.memory_space<vmem>>, vector<1x128xf32>
    %c0_12 = arith.constant 0 : index
    %c0_13 = arith.constant 0 : index
    %10 = vector.load %arg1[%c0_12, %c0_13] : memref<16x128xf32, #tpu.memory_space<vmem>>, vector<16x128xf32>
    %cst = arith.constant dense<0.000000e+00> : vector<48x128xf32>
    %11 = tpu.matmul %0, %10, %cst {dimension_numbers = #tpu.dot_dimension_numbers<[1], [0], [0], [1], [0, 0, 1, 1], [], []>} : vector<48x16xf32>, vector<16x128xf32>, vector<48x128xf32> -> vector<48x128xf32>
    %12 = vector.broadcast %1 : vector<48x1xf32> to vector<48x128xf32>
    %13 = arith.addf %11, %12 : vector<48x128xf32>
    %14 = vector.extract_strided_slice %13 {offsets = [0, 0], sizes = [16, 128], strides = [1, 1]} : vector<48x128xf32> to vector<16x128xf32>
    %15 = vector.extract_strided_slice %13 {offsets = [16, 0], sizes = [32, 128], strides = [1, 1]} : vector<48x128xf32> to vector<32x128xf32>
    %cst_14 = arith.constant 0.000000e+00 : f32
    %16 = vector.broadcast %cst_14 : f32 to vector<32x128xf32>
    %17 = arith.maximumf %15, %16 : vector<32x128xf32>
    %cst_15 = arith.constant dense<0.000000e+00> : vector<8x128xf32>
    %18 = tpu.matmul %2, %17, %cst_15 {dimension_numbers = #tpu.dot_dimension_numbers<[1], [0], [0], [1], [0, 0, 1, 1], [], []>} : vector<8x32xf32>, vector<32x128xf32>, vector<8x128xf32> -> vector<8x128xf32>
    %19 = vector.broadcast %5 : vector<8x1xf32> to vector<8x128xf32>
    %20 = arith.addf %18, %19 : vector<8x128xf32>
    %21 = math.absf %14 : vector<16x128xf32>
    %cst_16 = arith.constant 9.99999968E-21 : f32
    %22 = vector.broadcast %cst_16 : f32 to vector<16x128xf32>
    %23 = arith.cmpf olt, %21, %22 : vector<16x128xf32>
    %cst_17 = arith.constant 9.99999968E-21 : f32
    %24 = vector.broadcast %cst_17 : f32 to vector<16x128xf32>
    %25 = arith.select %23, %24, %14 : vector<16x128xi1>, vector<16x128xf32>
    %26 = math.absf %25 : vector<16x128xf32>
    %27 = math.log %26 : vector<16x128xf32>
    %cst_18 = arith.constant 0.000000e+00 : f32
    %28 = vector.broadcast %cst_18 : f32 to vector<16x128xf32>
    %29 = arith.cmpf olt, %25, %28 : vector<16x128xf32>
    %cst_19 = arith.constant 1.000000e+00 : f32
    %cst_20 = arith.constant 0.000000e+00 : f32
    %30 = vector.broadcast %cst_19 : f32 to vector<16x128xf32>
    %31 = vector.broadcast %cst_20 : f32 to vector<16x128xf32>
    %32 = arith.select %29, %30, %31 : vector<16x128xi1>, vector<16x128xf32>
    %33 = tpu.concatenate %20, %27, %32 in 0 : vector<8x128xf32>, vector<16x128xf32>, vector<16x128xf32> -> vector<40x128xf32>
    %cst_21 = arith.constant dense<0.000000e+00> : vector<40x128xf32>
    %34 = tpu.matmul %33, %6, %cst_21 {dimension_numbers = #tpu.dot_dimension_numbers<[1], [0], [0], [1], [0, 0, 1, 1], [], []>} : vector<40x128xf32>, vector<128x128xf32>, vector<40x128xf32> -> vector<40x128xf32>
    %35 = vector.extract_strided_slice %34 {offsets = [0, 0], sizes = [8, 128], strides = [1, 1]} : vector<40x128xf32> to vector<8x128xf32>
    %36 = vector.extract_strided_slice %34 {offsets = [8, 0], sizes = [16, 128], strides = [1, 1]} : vector<40x128xf32> to vector<16x128xf32>
    %37 = vector.extract_strided_slice %34 {offsets = [24, 0], sizes = [16, 128], strides = [1, 1]} : vector<40x128xf32> to vector<16x128xf32>
    %cst_22 = arith.constant 5.000000e-01 : f32
    %38 = vector.broadcast %cst_22 : f32 to vector<16x128xf32>
    %39 = arith.mulf %37, %38 : vector<16x128xf32>
    %40 = math.floor %39 : vector<16x128xf32>
    %cst_23 = arith.constant 2.000000e+00 : f32
    %41 = vector.broadcast %cst_23 : f32 to vector<16x128xf32>
    %42 = arith.mulf %41, %40 : vector<16x128xf32>
    %43 = arith.subf %37, %42 : vector<16x128xf32>
    %44 = math.exp %36 : vector<16x128xf32>
    %cst_24 = arith.constant 2.000000e+00 : f32
    %45 = vector.broadcast %cst_24 : f32 to vector<16x128xf32>
    %46 = arith.mulf %45, %43 : vector<16x128xf32>
    %cst_25 = arith.constant 1.000000e+00 : f32
    %47 = vector.broadcast %cst_25 : f32 to vector<16x128xf32>
    %48 = arith.subf %47, %46 : vector<16x128xf32>
    %49 = arith.mulf %44, %48 : vector<16x128xf32>
    %cst_26 = arith.constant 0.000000e+00 : f32
    %50 = vector.broadcast %cst_26 : f32 to vector<8x128xf32>
    %51 = arith.maximumf %35, %50 : vector<8x128xf32>
    %52 = vector.broadcast %8 : vector<1x128xf32> to vector<16x128xf32>
    %53 = arith.mulf %49, %52 : vector<16x128xf32>
    %54 = tpu.concatenate %51, %53 in 0 : vector<8x128xf32>, vector<16x128xf32> -> vector<24x128xf32>
    %cst_27 = arith.constant dense<0.000000e+00> : vector<24x128xf32>
    %55 = tpu.matmul %54, %7, %cst_27 {dimension_numbers = #tpu.dot_dimension_numbers<[1], [0], [0], [1], [0, 0, 1, 1], [], []>} : vector<24x128xf32>, vector<128x128xf32>, vector<24x128xf32> -> vector<24x128xf32>
    %56 = vector.extract_strided_slice %55 {offsets = [0, 0], sizes = [8, 128], strides = [1, 1]} : vector<24x128xf32> to vector<8x128xf32>
    %57 = vector.extract_strided_slice %55 {offsets = [8, 0], sizes = [16, 128], strides = [1, 1]} : vector<24x128xf32> to vector<16x128xf32>
    %58 = arith.divf %57, %25 : vector<16x128xf32>
    %cst_28 = arith.constant dense<0.000000e+00> : vector<8x128xf32>
    %59 = tpu.matmul %3, %58, %cst_28 {dimension_numbers = #tpu.dot_dimension_numbers<[1], [0], [0], [1], [0, 0, 1, 1], [], []>} : vector<8x16xf32>, vector<16x128xf32>, vector<8x128xf32> -> vector<8x128xf32>
    %60 = arith.addf %59, %56 : vector<8x128xf32>
    %61 = vector.broadcast %9 : vector<1x128xf32> to vector<8x128xf32>
    %62 = arith.mulf %60, %61 : vector<8x128xf32>
    %63 = vector.broadcast %4 : vector<8x1xf32> to vector<8x128xf32>
    %64 = arith.addf %62, %63 : vector<8x128xf32>
    %cst_29 = arith.constant 0.000000e+00 : f32
    %65 = vector.broadcast %cst_29 : f32 to vector<8x128xf32>
    %66 = arith.maximumf %64, %65 : vector<8x128xf32>
    %c0_30 = arith.constant 0 : index
    %c0_31 = arith.constant 0 : index
    %67 = vector.load %arg4[%c0_30, %c0_31] : memref<8x128xf32, #tpu.memory_space<vmem>>, vector<8x128xf32>
    tpu.vector_store %arg4[%c0_30, %c0_31], %66 {strides = array<i32>} : memref<8x128xf32, #tpu.memory_space<vmem>>, vector<8x128xf32>,
    return
  }
  func.func @transform_0(%arg0: i32) -> (i32, i32) {
    %c0_i32 = arith.constant 0 : i32
    %c0_i32_0 = arith.constant 0 : i32
    return %c0_i32, %arg0 : i32, i32
  }
  func.func @transform_1(%arg0: i32) -> (i32, i32) {
    %c0_i32 = arith.constant 0 : i32
    %c0_i32_0 = arith.constant 0 : i32
    %c0_i32_1 = arith.constant 0 : i32
    return %c0_i32, %c0_i32_0 : i32, i32
  }
  func.func @transform_2(%arg0: i32) -> (i32, i32) {
    %c0_i32 = arith.constant 0 : i32
    %c0_i32_0 = arith.constant 0 : i32
    %c0_i32_1 = arith.constant 0 : i32
    return %c0_i32, %c0_i32_0 : i32, i32
  }
  func.func @transform_3(%arg0: i32) -> (i32, i32) {
    %c0_i32 = arith.constant 0 : i32
    %c0_i32_0 = arith.constant 0 : i32
    return %c0_i32, %arg0 : i32, i32
  }
}

</mosaic_0001>

<llo_original>
// kernel: forward.1
$region0: #{forward.1}
  #allocation0 [shape = 'u32[]', space=smem, size = 0x4, offset = 0x4, fixed_abs, tag = 'smem constant byte address 0x4 - core index']
  #allocation1 [shape = 'u32[144,128]{1,0:T(1,128)}', space=vmem, size = 0x12000, scoped, tag = 'internal scratch']
  %s0 = inlined_call_operand.vmem [shape: f32[16,512], index: 0, kind: input, shape index: {}]
  %s1 = inlined_call_operand.vmem [shape: f32[72,32], index: 1, kind: input, shape index: {}]
  %s2 = inlined_call_operand.vmem [shape: f32[264,128], index: 2, kind: input, shape index: {}]
  %s3 = inlined_call_operand.vmem [shape: f32[8,512], index: 3, kind: output, shape index: {}]
  %s4 = sld [smem:[#allocation0]]
  $region83: #{forward.1} parent=0
    _
  %s6 = ssub.s32 1, %s4
  %s7 = scalar_select 0, %s6, %s4
  $region1: #{forward.1} parent=0
    #allocation2 [shape = 'u8[16384]{0}', space=vmem, size = 0x4000, scoped, tag = 'input window, operand 0']
    loop: start=0, step=1, limit=6
    $region2: #{forward.1} parent=1 // loop_pre_header
      _
    $region3: #{forward.1} parent=1 // loop_header
      %s9 = sphi 0, %s13
      %p10 = scmp.ge.s32.totalorder %s9, 6
      %s19 = sphi 0, %s21
      %s22 = sphi 0, %s19
      %s23 = sphi 0, %s22
      %s39 = sphi 0, %s23
      %s43 = sphi 0, %s43
      %s45 = sphi 0, %s43
      %s46 = sphi 0, %s45
      %s60 = sphi 0, %s46
      %s64 = sphi 0, %s64
      %s66 = sphi 0, %s64
      %s67 = sphi 0, %s66
      %s81 = sphi 0, %s67
      %s87 = sphi 0, %s89
      %s90 = sphi 0, %s87
      %s91 = sphi 0, %s90
      %s107 = sphi 0, %s91
    $region4: #{forward.1} parent=1 // loop_header_branch
      %12 = sbr.rel (%p10) target = $region8
    $region5: #{forward.1} parent=1 // loop_body
      %s14 = ssub.s32 %s9, 1
      %s15 = ssub.s32 %s9, 2
      %s16 = sadd.s32 %s9, 1
      %s17 = ssub.s32 %s9, %s16
      %p18 = scmp.eq.s32.totalorder %s17, 0
      %s20 = sadd.s32 %s19, 1
      %s21 = scalar_select %p18, %s19, %s20
      %p24 = pneg %p18
      %p25 = scmp.eq.s32.totalorder %s9, 3
      %p26 = por %p24, %p25
      %p27 = scmp.ne.s32.totalorder %s19, %s22
      %p28 = scmp.eq.s32.totalorder %s9, 0
      %p29 = por %p27, %p28
      %p30 = scmp.ne.s32.totalorder %s19, %s22
      %p31 = scmp.eq.s32.totalorder %s14, 3
      %p32 = por %p30, %p31
      %p33 = scmp.ne.s32.totalorder %s22, %s23
      %p34 = scmp.eq.s32.totalorder %s14, 0
      %p35 = por %p33, %p34
      %p36 = scmp.ne.s32.totalorder %s22, %s23
      %p37 = scmp.eq.s32.totalorder %s15, 3
      %p38 = por %p36, %p37
      %p40 = scmp.ne.s32.totalorder %s23, %s39
      %p41 = scmp.eq.s32.totalorder %s15, 0
      %p42 = por %p40, %p41
      %s44 = sadd.s32 %s43, 1
      %p47 = scmp.eq.s32.totalorder %s9, 3
      %p48 = scmp.ne.s32.totalorder %s43, %s45
      %p49 = scmp.eq.s32.totalorder %s9, 0
      %p50 = por %p48, %p49
      %p51 = scmp.ne.s32.totalorder %s43, %s45
      %p52 = scmp.eq.s32.totalorder %s14, 3
      %p53 = por %p51, %p52
      %p54 = scmp.ne.s32.totalorder %s45, %s46
      %p55 = scmp.eq.s32.totalorder %s14, 0
      %p56 = por %p54, %p55
      %p57 = scmp.ne.s32.totalorder %s45, %s46
      %p58 = scmp.eq.s32.totalorder %s15, 3
      %p59 = por %p57, %p58
      %p61 = scmp.ne.s32.totalorder %s46, %s60
      %p62 = scmp.eq.s32.totalorder %s15, 0
      %p63 = por %p61, %p62
      %s65 = sadd.s32 %s64, 1
      %p68 = scmp.eq.s32.totalorder %s9, 3
      %p69 = scmp.ne.s32.totalorder %s64, %s66
      %p70 = scmp.eq.s32.totalorder %s9, 0
      %p71 = por %p69, %p70
      %p72 = scmp.ne.s32.totalorder %s64, %s66
      %p73 = scmp.eq.s32.totalorder %s14, 3
      %p74 = por %p72, %p73
      %p75 = scmp.ne.s32.totalorder %s66, %s67
      %p76 = scmp.eq.s32.totalorder %s14, 0
      %p77 = por %p75, %p76
      %p78 = scmp.ne.s32.totalorder %s66, %s67
      %p79 = scmp.eq.s32.totalorder %s15, 3
      %p80 = por %p78, %p79
      %p82 = scmp.ne.s32.totalorder %s67, %s81
      %p83 = scmp.eq.s32.totalorder %s15, 0
      %p84 = por %p82, %p83
      %s85 = ssub.s32 %s9, %s16
      %p86 = scmp.eq.s32.totalorder %s85, 0
      %s88 = sadd.s32 %s87, 1
      %s89 = scalar_select %p86, %s87, %s88
      %p92 = pneg %p86
      %p93 = scmp.eq.s32.totalorder %s9, 3
      %p94 = por %p92, %p93
      %p95 = scmp.ne.s32.totalorder %s87, %s90
      %p96 = scmp.eq.s32.totalorder %s9, 0
      %p97 = por %p95, %p96
      %p98 = scmp.ne.s32.totalorder %s87, %s90
      %p99 = scmp.eq.s32.totalorder %s14, 3
      %p100 = por %p98, %p99
      %p101 = scmp.ne.s32.totalorder %s90, %s91
      %p102 = scmp.eq.s32.totalorder %s14, 0
      %p103 = por %p101, %p102
      %p104 = scmp.ne.s32.totalorder %s90, %s91
      %p105 = scmp.eq.s32.totalorder %s15, 3
      %p106 = por %p104, %p105
      %p108 = scmp.ne.s32.totalorder %s91, %s107
      %p109 = scmp.eq.s32.totalorder %s15, 0
      %p110 = por %p108, %p109
      %p111 = scmp.le.s32.totalorder 1, %s9
      %p112 = scmp.lt.s32.totalorder %s9, 5
      %p113 = pnand %p111, %p112
      %p114 = pneg %p113
      // Predicated region
      $region9: #{forward.1} parent=5 // pred_check
        _
      $region10: #{forward.1} parent=5 // pred_check_branch
        %116 = sbr.rel (%p113) target = $region12
      $region11: #{forward.1} parent=5 // pred_region
        %s117 = ssub.s32 %s9, 1
        // Predicated region
        $region13: #{forward.1} parent=11 // pred_check
          %p118 = pneg %p56
        $region14: #{forward.1} parent=11 // pred_check_branch
          %120 = sbr.rel (%p118) target = $region16
        $region15: #{forward.1} parent=11 // pred_region
          _
        $region16: #{forward.1} parent=11 // pred_fallthru
          _
        // Predicated region
        $region17: #{forward.1} parent=11 // pred_check
          %p121 = pneg %p77
        $region18: #{forward.1} parent=11 // pred_check_branch
          %123 = sbr.rel (%p121) target = $region20
        $region19: #{forward.1} parent=11 // pred_region
          _
        $region20: #{forward.1} parent=11 // pred_fallthru
          _
      $region12: #{forward.1} parent=5 // pred_fallthru
        _
      %p124 = scmp.lt.s32.totalorder %s9, 4
      // Predicated region
      $region21: #{forward.1} parent=5 // pred_check
        %p125 = pneg %p124
      $region22: #{forward.1} parent=5 // pred_check_branch
        %127 = sbr.rel (%p125) target = $region24
      $region23: #{forward.1} parent=5 // pred_region
        // Predicated region
        $region25: #{forward.1} parent=23 // pred_check
          %p128 = pneg %p29
        $region26: #{forward.1} parent=23 // pred_check_branch
          %130 = sbr.rel (%p128) target = $region28
        $region27: #{forward.1} parent=23 // pred_region
          %s131 = sand.u32 %s19, 1
          %s132 = sand.u32 %s19, 1
          %s133 = smul.addr %s132, 16
          %s134 = scalar_lea.vmem [#allocation2], %s133
          %s135 = smul.addr %s9, 8
          %s136 = scalar_lea.vmem %s0, %s135
          // Predicated region
          $region29: #{forward.1} parent=27 // pred_check
            _
          $region30: #{forward.1} parent=27 // pred_check_branch
            %138 = sbr.rel (0) target = $region32
          $region31: #{forward.1} parent=27 // pred_region
            // Predicated region
            $region33: #{forward.1} parent=31 // pred_check
              _
            $region34: #{forward.1} parent=31 // pred_check_branch
              %140 = sbr.rel (0) target = $region36
            $region35: #{forward.1} parent=31 // pred_region
              // Predicated region
              $region48: #{forward.1} parent=35 // pred_check
                _
              $region49: #{forward.1} parent=35 // pred_check_branch
                %157 = sbr.rel (0) target = $region51
              $region50: #{forward.1} parent=35 // pred_region
                loop: start=0, step=1, limit=1
                $region52: #{forward.1} parent=50 // loop_pre_header
                  _
                $region53: #{forward.1} parent=50 // loop_header
                  %s159 = sphi 0, %s163
                  %p160 = scmp.ge.s32.totalorder %s159, 1
                  %s164 = sphi %s136, %s136
                  %s165 = sphi %s134, %s134
                $region54: #{forward.1} parent=50 // loop_header_branch
                  %162 = sbr.rel (%p160) target = $region58
                $region55: #{forward.1} parent=50 // loop_body
                  %v166 = vld [vmem:[%s164] sm:$0xff]
                  %167 = vst [vmem:[%s165] sm:$0xff] %v166
                  %v168 = vld [vmem:[%s164 + $0x20] sm:$0xff]
                  %169 = vst [vmem:[%s165 + $0x8] sm:$0xff] %v168
                $region56: #{forward.1} parent=50 // loop_footer
                  %s163 = sadd.s32 1, %s159
                $region57: #{forward.1} parent=50 // loop_footer_branch
                  %158 = sbr.rel target = $region53
                $region58: #{forward.1} parent=50 // loop_exit
                  _
              $region51: #{forward.1} parent=35 // pred_fallthru
                _
              // Predicated region
              $region59: #{forward.1} parent=35 // pred_check
                _
              $region60: #{forward.1} parent=35 // pred_check_branch
                %171 = sbr.rel target = $region62
              $region61: #{forward.1} parent=35 // pred_region
                _
              $region62: #{forward.1} parent=35 // pred_fallthru
                _
            $region36: #{forward.1} parent=31 // pred_fallthru
              _
            // Predicated region
            $region37: #{forward.1} parent=31 // pred_check
              _
            $region38: #{forward.1} parent=31 // pred_check_branch
              %142 = sbr.rel target = $region40
            $region39: #{forward.1} parent=31 // pred_region
              loop: start=0, step=1, limit=1
              $region41: #{forward.1} parent=39 // loop_pre_header
                _
              $region42: #{forward.1} parent=39 // loop_header
                %s145 = sphi 0, %s149
                %p146 = scmp.ge.s32.totalorder %s145, 1
                %s150 = sphi %s136, %s136
                %s151 = sphi %s134, %s134
              $region43: #{forward.1} parent=39 // loop_header_branch
                %148 = sbr.rel (%p146) target = $region47
              $region44: #{forward.1} parent=39 // loop_body
                %v152 = vld [vmem:[%s150] sm:$0xff]
                %153 = vst [vmem:[%s151] sm:$0xff] %v152
                %v154 = vld [vmem:[%s150 + $0x20] sm:$0xff]
                %155 = vst [vmem:[%s151 + $0x8] sm:$0xff] %v154
              $region45: #{forward.1} parent=39 // loop_footer
                %s149 = sadd.s32 1, %s145
              $region46: #{forward.1} parent=39 // loop_footer_branch
                %144 = sbr.rel target = $region42
              $region47: #{forward.1} parent=39 // loop_exit
                _
            $region40: #{forward.1} parent=31 // pred_fallthru
              _
          $region32: #{forward.1} parent=27 // pred_fallthru
            _
          %172 = vnop
        $region28: #{forward.1} parent=23 // pred_fallthru
          _
      $region24: #{forward.1} parent=5 // pred_fallthru
        _
      %p173 = scmp.le.s32.totalorder 1, %s9
      %p174 = scmp.lt.s32.totalorder %s9, 5
      %p175 = pnand %p173, %p174
      %p176 = pneg %p175
      // Predicated region
      $region63: #{forward.1} parent=5 // pred_check
        _
      $region64: #{forward.1} parent=5 // pred_check_branch
        %178 = sbr.rel (%p175) target = $region66
      $region65: #{forward.1} parent=5 // pred_region
        %s179 = ssub.s32 %s9, 1
        %s180 = sand.u32 %s22, 1
        %s181 = sand.u32 %s22, 1
        %s182 = smul.addr %s181, 16
        %s183 = scalar_lea.vmem [#allocation2], %s182
        // Predicated region
        $region67: #{forward.1} parent=65 // pred_check
          %p184 = pneg %p35
        $region68: #{forward.1} parent=65 // pred_check_branch
          %186 = sbr.rel (%p184) target = $region70
        $region69: #{forward.1} parent=65 // pred_region
          _
        $region70: #{forward.1} parent=65 // pred_fallthru
          _
        %s187 = sand.u32 %s22, 1
        %s188 = sand.u32 %s22, 1
        %s189 = smul.addr %s188, 16
        %s190 = scalar_lea.vmem [#allocation2], %s189
        %p191 = pneg %p35
        %p192 = pneg %p32
        %p193 = pneg %p56
        %p194 = pneg %p53
        %p195 = pneg %p77
        %p196 = pneg %p74
        %p197 = pneg %p103
        %p198 = pneg %p100
        %p199 = scmp.lt.s32.totalorder %s14, 3
        %s200 = scalar_select %p199, %s14, 3
        %s201 = smul.addr %s200, 8
        %s202 = scalar_lea.vmem %s3, %s201
        %p203 = scmp.lt.s32.totalorder %s14, 3
        %s204 = scalar_select %p203, %s14, 3
        %s205 = smul.addr %s204, 8
        %s206 = scalar_lea.vmem %s3, %s205
        %v207 = vld [vmem:[%s1] sm:$0xff]
        %v208 = vld [vmem:[%s1 + $0x8] sm:$0xff]
        %v209 = vld [vmem:[%s1 + $0x10] sm:$0xff]
        %v210 = vld [vmem:[%s1 + $0x18] sm:$0xff]
        %v211 = vld [vmem:[%s1 + $0x20] sm:$0xff]
        %v212 = vld [vmem:[%s1 + $0x28] sm:$0xff]
        %v213 = vld [vmem:[%s1 + $0x30] sm:$0xff]
        %v214 = vld [vmem:[%s1 + $0x38] sm:$0xff]
        %v215 = vld [vmem:[%s1 + $0x40] sm:$0xff]
        %v216 = vld [vmem:[%s2] sm:$0xff]
        %v217 = vld [vmem:[%s2 + $0x8] sm:$0xff]
        %v218 = vld [vmem:[%s2 + $0x10] sm:$0xff]
        %v219 = vld [vmem:[%s2 + $0x18] sm:$0xff]
        %v220 = vld [vmem:[%s2 + $0x20] sm:$0xff]
        %v221 = vld [vmem:[%s2 + $0x28] sm:$0xff]
        %v222 = vld [vmem:[%s2 + $0x30] sm:$0xff]
        %v223 = vld [vmem:[%s2 + $0x38] sm:$0xff]
        %v224 = vld [vmem:[%s2 + $0x40] sm:$0xff]
        %v225 = vld [vmem:[%s2 + $0x48] sm:$0xff]
        %v226 = vld [vmem:[%s2 + $0x50] sm:$0xff]
        %v227 = vld [vmem:[%s2 + $0x58] sm:$0xff]
        %v228 = vld [vmem:[%s2 + $0x60] sm:$0xff]
        %v229 = vld [vmem:[%s2 + $0x68] sm:$0xff]
        %v230 = vld [vmem:[%s2 + $0x70] sm:$0xff]
        %v231 = vld [vmem:[%s2 + $0x78] sm:$0xff]
        %v232 = vld [vmem:[%s2 + $0x80] sm:$0xff]
        %v233 = vld [vmem:[%s2 + $0x88] sm:$0xff]
        %v234 = vld [vmem:[%s2 + $0x90] sm:$0xff]
        %v235 = vld [vmem:[%s2 + $0x98] sm:$0xff]
        %v236 = vld [vmem:[%s2 + $0xa0] sm:$0xff]
        %v237 = vld [vmem:[%s2 + $0xa8] sm:$0xff]
        %v238 = vld [vmem:[%s2 + $0xb0] sm:$0xff]
        %v239 = vld [vmem:[%s2 + $0xb8] sm:$0xff]
        %v240 = vld [vmem:[%s2 + $0xc0] sm:$0xff]
        %v241 = vld [vmem:[%s2 + $0xc8] sm:$0xff]
        %v242 = vld [vmem:[%s2 + $0xd0] sm:$0xff]
        %v243 = vld [vmem:[%s2 + $0xd8] sm:$0xff]
        %v244 = vld [vmem:[%s2 + $0xe0] sm:$0xff]
        %v245 = vld [vmem:[%s2 + $0xe8] sm:$0xff]
        %v246 = vld [vmem:[%s2 + $0xf0] sm:$0xff]
        %v247 = vld [vmem:[%s2 + $0xf8] sm:$0xff]
        %v248 = vld [vmem:[%s2 + $0x100] sm:$0x1]
        %v249 = vld [vmem:[%s2 + $0x101] sm:$0x1]
        %v250 = vld [vmem:[%s183] sm:$0xff]
        %v251 = vld [vmem:[%s183 + $0x8] sm:$0xff]
        %253 = vset.pattern.permute.xlu0 16
        %254 = vperm.xlu0 %253, %v207
        %v255 = vpop.permute.xlu0 %254
        %258 = vset.pattern.permute.xlu0 16
        %259 = vperm.xlu0 %258, %v208
        %v260 = vpop.permute.xlu0 %259
        %263 = vset.pattern.permute.xlu0 16
        %264 = vperm.xlu0 %263, %v209
        %v265 = vpop.permute.xlu0 %264
        %268 = vset.pattern.permute.xlu0 16
        %269 = vperm.xlu0 %268, %v210
        %v270 = vpop.permute.xlu0 %269
        %273 = vset.pattern.permute.xlu0 16
        %274 = vperm.xlu0 %273, %v211
        %v275 = vpop.permute.xlu0 %274
        %278 = vset.pattern.permute.xlu0 16
        %279 = vperm.xlu0 %278, %v212
        %v280 = vpop.permute.xlu0 %279
        %vm282 = vcmask 130048
        %v283 = vsel %vm282, %v207, 0
        %v285 = vsel %vm282, %v208, 0
        %v287 = vsel %vm282, %v209, 0
        %v289 = vsel %vm282, %v210, 0
        %v291 = vsel %vm282, %v211, 0
        %v293 = vsel %vm282, %v212, 0
        %295 = vmatprep.subr.mxu0 0.0
        %296 = vmatpush1.msra.mxu0 %v250
        %297 = vmatprep.subr.mxu0 0.0
        %298 = vmatpush1.msra.mxu0 %v251
        %299 = vmatprep.subr.mxu0 0.0
        %300 = vmatpush1.msra.mxu0 0.0
        %301 = vmatprep.subr.mxu0 0.0
        %302 = vmatpush1.msra.mxu0 0.0
        %303 = vmatprep.subr.mxu0 0.0
        %304 = vmatpush1.msra.mxu0 0.0
        %305 = vmatprep.subr.mxu0 0.0
        %306 = vmatpush1.msra.mxu0 0.0
        %307 = vmatprep.subr.mxu0 0.0
        %308 = vmatpush1.msra.mxu0 0.0
        %309 = vmatprep.subr.mxu0 0.0
        %310 = vmatpush1.msra.mxu0 0.0
        %311 = vmatprep.subr.mxu0 0.0
        %312 = vmatpush1.msra.mxu0 0.0
        %313 = vmatprep.subr.mxu0 0.0
        %314 = vmatpush1.msra.mxu0 0.0
        %315 = vmatprep.subr.mxu0 0.0
        %316 = vmatpush1.msra.mxu0 0.0
        %317 = vmatprep.subr.mxu0 0.0
        %318 = vmatpush1.msra.mxu0 0.0
        %319 = vmatprep.subr.mxu0 0.0
        %320 = vmatpush1.msra.mxu0 0.0
        %321 = vmatprep.subr.mxu0 0.0
        %322 = vmatpush1.msra.mxu0 0.0
        %323 = vmatprep.subr.mxu0 0.0
        %324 = vmatpush1.msra.mxu0 0.0
        %325 = vmatprep.subr.mxu0 0.0
        %326 = vmatpush1.msra.mxu0 0.0
        %327 = vmatprep.subr.mxu0 0.0
        %328 = vmatpush1.msra.mxu0 0.0
        %329 = vmatprep.subr.mxu0 0.0
        %330 = vmatpush1.msra.mxu0 0.0
        %331 = vmatprep.subr.mxu0 0.0
        %332 = vmatpush1.msra.mxu0 0.0
        %333 = vmatprep.subr.mxu0 0.0
        %334 = vmatpush1.msra.mxu0 0.0
        %335 = vmatprep.subr.mxu0 0.0
        %336 = vmatpush1.msra.mxu0 0.0
        %337 = vmatprep.subr.mxu0 0.0
        %338 = vmatpush1.msra.mxu0 0.0
        %339 = vmatprep.subr.mxu0 0.0
        %340 = vmatpush1.msra.mxu0 0.0
        %341 = vmatprep.subr.mxu0 0.0
        %342 = vmatpush1.msra.mxu0 0.0
        %343 = vmatprep.subr.mxu0 0.0
        %344 = vmatpush1.msra.mxu0 0.0
        %345 = vmatprep.subr.mxu0 0.0
        %346 = vmatpush1.msra.mxu0 0.0
        %347 = vmatprep.subr.mxu0 0.0
        %348 = vmatpush1.msra.mxu0 0.0
        %349 = vmatprep.subr.mxu0 0.0
        %350 = vmatpush1.msra.mxu0 0.0
        %351 = vmatprep.subr.mxu0 0.0
        %352 = vmatpush1.msra.mxu0 0.0
        %353 = vmatprep.subr.mxu0 0.0
        %354 = vmatpush1.msra.mxu0 0.0
        %355 = vmatprep.subr.mxu0 0.0
        %356 = vmatpush1.msra.mxu0 0.0
        %357 = vmatprep.subr.mxu0 0.0
        %358 = vmatpush1.msra.mxu0 0.0
        %359 = vmatprep.mubr.f32.mxu0 0.0
        %360 = vmatmul.mubr.f32.gmra.mrb[0].mxu0 %v283
        %v361 = vpop.f32.mrb[0].mxu0
        %v362 = vadd.f32 %v255, %v361
        %v363 = vpop.f32.mrb[0].mxu0
        %364 = vmatprep.mubr.f32.mxu0 0.0
        %365 = vmatmul.mubr.f32.gmra.mrb[0].mxu0 %v285
        %v366 = vpop.f32.mrb[0].mxu0
        %v367 = vadd.f32 %v260, %v366
        %v368 = vpop.f32.mrb[0].mxu0
        %369 = vmatprep.mubr.f32.mxu0 0.0
        %370 = vmatmul.mubr.f32.gmra.mrb[0].mxu0 %v287
        %v371 = vpop.f32.mrb[0].mxu0
        %v372 = vadd.f32 %v265, %v371
        %v373 = vpop.f32.mrb[0].mxu0
        %374 = vmatprep.mubr.f32.mxu0 0.0
        %375 = vmatmul.mubr.f32.gmra.mrb[0].mxu0 %v289
        %v376 = vpop.f32.mrb[0].mxu0
        %v377 = vadd.f32 %v270, %v376
        %v378 = vpop.f32.mrb[0].mxu0
        %379 = vmatprep.mubr.f32.mxu0 0.0
        %380 = vmatmul.mubr.f32.gmra.mrb[0].mxu0 %v291
        %v381 = vpop.f32.mrb[0].mxu0
        %v382 = vadd.f32 %v275, %v381
        %v383 = vpop.f32.mrb[0].mxu0
        %384 = vmatprep.mubr.f32.mxu0 0.0
        %385 = vmatmul.mubr.f32.gmra.mrb[0].mxu0 %v293
        %v386 = vpop.f32.mrb[0].mxu0
        %v387 = vadd.f32 %v280, %v386
        %v388 = vpop.f32.mrb[0].mxu0
        %389 = vdwg.mxu0
        %v390 = vmax.f32 %v372, 0.0
        %v391 = vmax.f32 %v377, 0.0
        %v392 = vmax.f32 %v382, 0.0
        %v393 = vmax.f32 %v387, 0.0
        %395 = vset.pattern.permute.xlu0 0
        %396 = vperm.xlu0 %395, %v215
        %v397 = vpop.permute.xlu0 %396
        %vm399 = vcmask 261120
        %v401 = vsel %vm399, %v213, 0
        %403 = vmatprep.subr.mxu0 0.0
        %404 = vmatpush1.msra.mxu0 %v390
        %405 = vmatprep.subr.mxu0 0.0
        %406 = vmatpush1.msra.mxu0 %v391
        %407 = vmatprep.subr.mxu0 0.0
        %408 = vmatpush1.msra.mxu0 %v392
        %409 = vmatprep.subr.mxu0 0.0
        %410 = vmatpush1.msra.mxu0 %v393
        %411 = vmatprep.subr.mxu0 0.0
        %412 = vmatpush1.msra.mxu0 0.0
        %413 = vmatprep.subr.mxu0 0.0
        %414 = vmatpush1.msra.mxu0 0.0
        %415 = vmatprep.subr.mxu0 0.0
        %416 = vmatpush1.msra.mxu0 0.0
        %417 = vmatprep.subr.mxu0 0.0
        %418 = vmatpush1.msra.mxu0 0.0
        %419 = vmatprep.subr.mxu0 0.0
        %420 = vmatpush1.msra.mxu0 0.0
        %421 = vmatprep.subr.mxu0 0.0
        %422 = vmatpush1.msra.mxu0 0.0
        %423 = vmatprep.subr.mxu0 0.0
        %424 = vmatpush1.msra.mxu0 0.0
        %425 = vmatprep.subr.mxu0 0.0
        %426 = vmatpush1.msra.mxu0 0.0
        %427 = vmatprep.subr.mxu0 0.0
        %428 = vmatpush1.msra.mxu0 0.0
        %429 = vmatprep.subr.mxu0 0.0
        %430 = vmatpush1.msra.mxu0 0.0
        %431 = vmatprep.subr.mxu0 0.0
        %432 = vmatpush1.msra.mxu0 0.0
        %433 = vmatprep.subr.mxu0 0.0
        %434 = vmatpush1.msra.mxu0 0.0
        %435 = vmatprep.subr.mxu0 0.0
        %436 = vmatpush1.msra.mxu0 0.0
        %437 = vmatprep.subr.mxu0 0.0
        %438 = vmatpush1.msra.mxu0 0.0
        %439 = vmatprep.subr.mxu0 0.0
        %440 = vmatpush1.msra.mxu0 0.0
        %441 = vmatprep.subr.mxu0 0.0
        %442 = vmatpush1.msra.mxu0 0.0
        %443 = vmatprep.subr.mxu0 0.0
        %444 = vmatpush1.msra.mxu0 0.0
        %445 = vmatprep.subr.mxu0 0.0
        %446 = vmatpush1.msra.mxu0 0.0
        %447 = vmatprep.subr.mxu0 0.0
        %448 = vmatpush1.msra.mxu0 0.0
        %449 = vmatprep.subr.mxu0 0.0
        %450 = vmatpush1.msra.mxu0 0.0
        %451 = vmatprep.subr.mxu0 0.0
        %452 = vmatpush1.msra.mxu0 0.0
        %453 = vmatprep.subr.mxu0 0.0
        %454 = vmatpush1.msra.mxu0 0.0
        %455 = vmatprep.subr.mxu0 0.0
        %456 = vmatpush1.msra.mxu0 0.0
        %457 = vmatprep.subr.mxu0 0.0
        %458 = vmatpush1.msra.mxu0 0.0
        %459 = vmatprep.subr.mxu0 0.0
        %460 = vmatpush1.msra.mxu0 0.0
        %461 = vmatprep.subr.mxu0 0.0
        %462 = vmatpush1.msra.mxu0 0.0
        %463 = vmatprep.subr.mxu0 0.0
        %464 = vmatpush1.msra.mxu0 0.0
        %465 = vmatprep.subr.mxu0 0.0
        %466 = vmatpush1.msra.mxu0 0.0
        %467 = vmatprep.mubr.f32.mxu0 0.0
        %468 = vmatmul.mubr.f32.gmra.mrb[0].mxu0 %v401
        %v469 = vpop.f32.mrb[0].mxu0
        %v470 = vadd.f32 %v397, %v469
        %v471 = vpop.f32.mrb[0].mxu0
        %472 = vdwg.mxu0
        %v473 = vand.u32 2147483647, %v362
        %v474 = vand.u32 2147483647, %v367
        %vm475 = vcmp.lt.f32.partialorder %v473, 1e-20
        %vm476 = vcmp.lt.f32.partialorder %v474, 1e-20
        %v477 = vsel %vm475, 1e-20, %v362
        %v478 = vsel %vm476, 1e-20, %v367
        %v479 = vand.u32 2147483647, %v477
        %v480 = vand.u32 2147483647, %v478
        %v481 = vlog2.pop %v479
        %v482 = vmul.f32 %v481, 0.6931472
        %v483 = vlog2.pop %v480
        %v484 = vmul.f32 %v483, 0.6931472
        %vm485 = vcmp.lt.f32.partialorder %v477, 0.0
        %vm486 = vcmp.lt.f32.partialorder %v478, 0.0
        %v487 = vsel %vm485, 1.0, 0.0
        %v488 = vsel %vm486, 1.0, 0.0
        %489 = vmatprep.subr.mxu0 0.0
        %490 = vmatpush1.msra.mxu0 %v216
        %491 = vmatprep.subr.mxu0 0.0
        %492 = vmatpush1.msra.mxu0 %v217
        %493 = vmatprep.subr.mxu0 0.0
        %494 = vmatpush1.msra.mxu0 %v218
        %495 = vmatprep.subr.mxu0 0.0
        %496 = vmatpush1.msra.mxu0 %v219
        %497 = vmatprep.subr.mxu0 0.0
        %498 = vmatpush1.msra.mxu0 %v220
        %499 = vmatprep.subr.mxu0 0.0
        %500 = vmatpush1.msra.mxu0 %v221
        %501 = vmatprep.subr.mxu0 0.0
        %502 = vmatpush1.msra.mxu0 %v222
        %503 = vmatprep.subr.mxu0 0.0
        %504 = vmatpush1.msra.mxu0 %v223
        %505 = vmatprep.subr.mxu0 0.0
        %506 = vmatpush1.msra.mxu0 %v224
        %507 = vmatprep.subr.mxu0 0.0
        %508 = vmatpush1.msra.mxu0 %v225
        %509 = vmatprep.subr.mxu0 0.0
        %510 = vmatpush1.msra.mxu0 %v226
        %511 = vmatprep.subr.mxu0 0.0
        %512 = vmatpush1.msra.mxu0 %v227
        %513 = vmatprep.subr.mxu0 0.0
        %514 = vmatpush1.msra.mxu0 %v228
        %515 = vmatprep.subr.mxu0 0.0
        %516 = vmatpush1.msra.mxu0 %v229
        %517 = vmatprep.subr.mxu0 0.0
        %518 = vmatpush1.msra.mxu0 %v230
        %519 = vmatprep.subr.mxu0 0.0
        %520 = vmatpush1.msra.mxu0 %v231
        %521 = vmatprep.subr.mxu0 0.0
        %522 = vmatpush1.msra.mxu0 0.0
        %523 = vmatprep.subr.mxu0 0.0
        %524 = vmatpush1.msra.mxu0 0.0
        %525 = vmatprep.subr.mxu0 0.0
        %526 = vmatpush1.msra.mxu0 0.0
        %527 = vmatprep.subr.mxu0 0.0
        %528 = vmatpush1.msra.mxu0 0.0
        %529 = vmatprep.subr.mxu0 0.0
        %530 = vmatpush1.msra.mxu0 0.0
        %531 = vmatprep.subr.mxu0 0.0
        %532 = vmatpush1.msra.mxu0 0.0
        %533 = vmatprep.subr.mxu0 0.0
        %534 = vmatpush1.msra.mxu0 0.0
        %535 = vmatprep.subr.mxu0 0.0
        %536 = vmatpush1.msra.mxu0 0.0
        %537 = vmatprep.subr.mxu0 0.0
        %538 = vmatpush1.msra.mxu0 0.0
        %539 = vmatprep.subr.mxu0 0.0
        %540 = vmatpush1.msra.mxu0 0.0
        %541 = vmatprep.subr.mxu0 0.0
        %542 = vmatpush1.msra.mxu0 0.0
        %543 = vmatprep.subr.mxu0 0.0
        %544 = vmatpush1.msra.mxu0 0.0
        %545 = vmatprep.subr.mxu0 0.0
        %546 = vmatpush1.msra.mxu0 0.0
        %547 = vmatprep.subr.mxu0 0.0
        %548 = vmatpush1.msra.mxu0 0.0
        %549 = vmatprep.subr.mxu0 0.0
        %550 = vmatpush1.msra.mxu0 0.0
        %551 = vmatprep.subr.mxu0 0.0
        %552 = vmatpush1.msra.mxu0 0.0
        %553 = vmatprep.mubr.f32.mxu0 0.0
        %554 = vmatmul.mubr.f32.gmra.mrb[0].mxu0 %v470
        %v555 = vpop.f32.mrb[0].mxu0
        %v556 = vadd.f32 0.0, %v555
        %v557 = vpop.f32.mrb[0].mxu0
        %558 = vmatprep.mubr.f32.mxu0 0.0
        %559 = vmatmul.mubr.f32.gmra.mrb[0].mxu0 %v482
        %v560 = vpop.f32.mrb[0].mxu0
        %v561 = vadd.f32 0.0, %v560
        %v562 = vpop.f32.mrb[0].mxu0
        %563 = vmatprep.mubr.f32.mxu0 0.0
        %564 = vmatmul.mubr.f32.gmra.mrb[0].mxu0 %v484
        %v565 = vpop.f32.mrb[0].mxu0
        %v566 = vadd.f32 0.0, %v565
        %v567 = vpop.f32.mrb[0].mxu0
        %568 = vmatprep.mubr.f32.mxu0 0.0
        %569 = vmatmul.mubr.f32.gmra.mrb[0].mxu0 %v487
        %v570 = vpop.f32.mrb[0].mxu0
        %v571 = vadd.f32 0.0, %v570
        %v572 = vpop.f32.mrb[0].mxu0
        %573 = vmatprep.mubr.f32.mxu0 0.0
        %574 = vmatmul.mubr.f32.gmra.mrb[0].mxu0 %v488
        %v575 = vpop.f32.mrb[0].mxu0
        %v576 = vadd.f32 0.0, %v575
        %v577 = vpop.f32.mrb[0].mxu0
        %578 = vdwg.mxu0
        %v579 = vmul.f32 %v571, 0.5
        %v580 = vmul.f32 %v576, 0.5
        %v581 = vfloor.f32 %v579
        %v582 = vfloor.f32 %v580
        %v583 = vmul.f32 %v581, 2.0
        %v584 = vmul.f32 %v582, 2.0
        %v585 = vsub.f32 %v571, %v583
        %v586 = vsub.f32 %v576, %v584
        %v587 = vmul.f32 %v561, 1.442695
        %v588 = vpow.pop %v587
        %v589 = vmul.f32 %v566, 1.442695
        %v590 = vpow.pop %v589
        %v591 = vmul.f32 %v585, 2.0
        %v592 = vmul.f32 %v586, 2.0
        %v593 = vsub.f32 1.0, %v591
        %v594 = vsub.f32 1.0, %v592
        %v595 = vmul.f32 %v588, %v593
        %v596 = vmul.f32 %v590, %v594
        %v597 = vmax.f32 %v556, 0.0
        %v598 = vlaneseq
        %v599 = vshrl.u32 %v598, 7
        %v600 = vsub.s32 0, %v599
        %v601 = vrot.slane %v248, %v600
        %v602 = vmul.f32 %v595, %v601
        %v603 = vmul.f32 %v596, %v601
        %604 = vmatprep.subr.mxu0 0.0
        %605 = vmatpush1.msra.mxu0 %v232
        %606 = vmatprep.subr.mxu0 0.0
        %607 = vmatpush1.msra.mxu0 %v233
        %608 = vmatprep.subr.mxu0 0.0
        %609 = vmatpush1.msra.mxu0 %v234
        %610 = vmatprep.subr.mxu0 0.0
        %611 = vmatpush1.msra.mxu0 %v235
        %612 = vmatprep.subr.mxu0 0.0
        %613 = vmatpush1.msra.mxu0 %v236
        %614 = vmatprep.subr.mxu0 0.0
        %615 = vmatpush1.msra.mxu0 %v237
        %616 = vmatprep.subr.mxu0 0.0
        %617 = vmatpush1.msra.mxu0 %v238
        %618 = vmatprep.subr.mxu0 0.0
        %619 = vmatpush1.msra.mxu0 %v239
        %620 = vmatprep.subr.mxu0 0.0
        %621 = vmatpush1.msra.mxu0 %v240
        %622 = vmatprep.subr.mxu0 0.0
        %623 = vmatpush1.msra.mxu0 %v241
        %624 = vmatprep.subr.mxu0 0.0
        %625 = vmatpush1.msra.mxu0 %v242
        %626 = vmatprep.subr.mxu0 0.0
        %627 = vmatpush1.msra.mxu0 %v243
        %628 = vmatprep.subr.mxu0 0.0
        %629 = vmatpush1.msra.mxu0 %v244
        %630 = vmatprep.subr.mxu0 0.0
        %631 = vmatpush1.msra.mxu0 %v245
        %632 = vmatprep.subr.mxu0 0.0
        %633 = vmatpush1.msra.mxu0 %v246
        %634 = vmatprep.subr.mxu0 0.0
        %635 = vmatpush1.msra.mxu0 %v247
        %636 = vmatprep.subr.mxu0 0.0
        %637 = vmatpush1.msra.mxu0 0.0
        %638 = vmatprep.subr.mxu0 0.0
        %639 = vmatpush1.msra.mxu0 0.0
        %640 = vmatprep.subr.mxu0 0.0
        %641 = vmatpush1.msra.mxu0 0.0
        %642 = vmatprep.subr.mxu0 0.0
        %643 = vmatpush1.msra.mxu0 0.0
        %644 = vmatprep.subr.mxu0 0.0
        %645 = vmatpush1.msra.mxu0 0.0
        %646 = vmatprep.subr.mxu0 0.0
        %647 = vmatpush1.msra.mxu0 0.0
        %648 = vmatprep.subr.mxu0 0.0
        %649 = vmatpush1.msra.mxu0 0.0
        %650 = vmatprep.subr.mxu0 0.0
        %651 = vmatpush1.msra.mxu0 0.0
        %652 = vmatprep.subr.mxu0 0.0
        %653 = vmatpush1.msra.mxu0 0.0
        %654 = vmatprep.subr.mxu0 0.0
        %655 = vmatpush1.msra.mxu0 0.0
        %656 = vmatprep.subr.mxu0 0.0
        %657 = vmatpush1.msra.mxu0 0.0
        %658 = vmatprep.subr.mxu0 0.0
        %659 = vmatpush1.msra.mxu0 0.0
        %660 = vmatprep.subr.mxu0 0.0
        %661 = vmatpush1.msra.mxu0 0.0
        %662 = vmatprep.subr.mxu0 0.0
        %663 = vmatpush1.msra.mxu0 0.0
        %664 = vmatprep.subr.mxu0 0.0
        %665 = vmatpush1.msra.mxu0 0.0
        %666 = vmatprep.subr.mxu0 0.0
        %667 = vmatpush1.msra.mxu0 0.0
        %668 = vmatprep.mubr.f32.mxu0 0.0
        %669 = vmatmul.mubr.f32.gmra.mrb[0].mxu0 %v597
        %v670 = vpop.f32.mrb[0].mxu0
        %v671 = vadd.f32 0.0, %v670
        %v672 = vpop.f32.mrb[0].mxu0
        %673 = vmatprep.mubr.f32.mxu0 0.0
        %674 = vmatmul.mubr.f32.gmra.mrb[0].mxu0 %v602
        %v675 = vpop.f32.mrb[0].mxu0
        %v676 = vadd.f32 0.0, %v675
        %v677 = vpop.f32.mrb[0].mxu0
        %678 = vmatprep.mubr.f32.mxu0 0.0
        %679 = vmatmul.mubr.f32.gmra.mrb[0].mxu0 %v603
        %v680 = vpop.f32.mrb[0].mxu0
        %v681 = vadd.f32 0.0, %v680
        %v682 = vpop.f32.mrb[0].mxu0
        %683 = vdwg.mxu0
        %v684 = vrcp.pop %v477
        %v685 = vmul.f32 %v676, %v684
        %v686 = vrcp.pop %v478
        %v687 = vmul.f32 %v681, %v686
        %v689 = vsel %vm282, %v214, 0
        %691 = vmatprep.subr.mxu0 0.0
        %692 = vmatpush1.msra.mxu0 %v685
        %693 = vmatprep.subr.mxu0 0.0
        %694 = vmatpush1.msra.mxu0 %v687
        %695 = vmatprep.subr.mxu0 0.0
        %696 = vmatpush1.msra.mxu0 0.0
        %697 = vmatprep.subr.mxu0 0.0
        %698 = vmatpush1.msra.mxu0 0.0
        %699 = vmatprep.subr.mxu0 0.0
        %700 = vmatpush1.msra.mxu0 0.0
        %701 = vmatprep.subr.mxu0 0.0
        %702 = vmatpush1.msra.mxu0 0.0
        %703 = vmatprep.subr.mxu0 0.0
        %704 = vmatpush1.msra.mxu0 0.0
        %705 = vmatprep.subr.mxu0 0.0
        %706 = vmatpush1.msra.mxu0 0.0
        %707 = vmatprep.subr.mxu0 0.0
        %708 = vmatpush1.msra.mxu0 0.0
        %709 = vmatprep.subr.mxu0 0.0
        %710 = vmatpush1.msra.mxu0 0.0
        %711 = vmatprep.subr.mxu0 0.0
        %712 = vmatpush1.msra.mxu0 0.0
        %713 = vmatprep.subr.mxu0 0.0
        %714 = vmatpush1.msra.mxu0 0.0
        %715 = vmatprep.subr.mxu0 0.0
        %716 = vmatpush1.msra.mxu0 0.0
        %717 = vmatprep.subr.mxu0 0.0
        %718 = vmatpush1.msra.mxu0 0.0
        %719 = vmatprep.subr.mxu0 0.0
        %720 = vmatpush1.msra.mxu0 0.0
        %721 = vmatprep.subr.mxu0 0.0
        %722 = vmatpush1.msra.mxu0 0.0
        %723 = vmatprep.subr.mxu0 0.0
        %724 = vmatpush1.msra.mxu0 0.0
        %725 = vmatprep.subr.mxu0 0.0
        %726 = vmatpush1.msra.mxu0 0.0
        %727 = vmatprep.subr.mxu0 0.0
        %728 = vmatpush1.msra.mxu0 0.0
        %729 = vmatprep.subr.mxu0 0.0
        %730 = vmatpush1.msra.mxu0 0.0
        %731 = vmatprep.subr.mxu0 0.0
        %732 = vmatpush1.msra.mxu0 0.0
        %733 = vmatprep.subr.mxu0 0.0
        %734 = vmatpush1.msra.mxu0 0.0
        %735 = vmatprep.subr.mxu0 0.0
        %736 = vmatpush1.msra.mxu0 0.0
        %737 = vmatprep.subr.mxu0 0.0
        %738 = vmatpush1.msra.mxu0 0.0
        %739 = vmatprep.subr.mxu0 0.0
        %740 = vmatpush1.msra.mxu0 0.0
        %741 = vmatprep.subr.mxu0 0.0
        %742 = vmatpush1.msra.mxu0 0.0
        %743 = vmatprep.subr.mxu0 0.0
        %744 = vmatpush1.msra.mxu0 0.0
        %745 = vmatprep.subr.mxu0 0.0
        %746 = vmatpush1.msra.mxu0 0.0
        %747 = vmatprep.subr.mxu0 0.0
        %748 = vmatpush1.msra.mxu0 0.0
        %749 = vmatprep.subr.mxu0 0.0
        %750 = vmatpush1.msra.mxu0 0.0
        %751 = vmatprep.subr.mxu0 0.0
        %752 = vmatpush1.msra.mxu0 0.0
        %753 = vmatprep.subr.mxu0 0.0
        %754 = vmatpush1.msra.mxu0 0.0
        %755 = vmatprep.mubr.f32.mxu0 0.0
        %756 = vmatmul.mubr.f32.gmra.mrb[0].mxu0 %v689
        %v757 = vpop.f32.mrb[0].mxu0
        %v758 = vadd.f32 %v671, %v757
        %v759 = vpop.f32.mrb[0].mxu0
        %760 = vdwg.mxu0
        %v761 = vlaneseq
        %v762 = vshrl.u32 %v761, 7
        %v763 = vsub.s32 0, %v762
        %v764 = vrot.slane %v249, %v763
        %v765 = vmul.f32 %v758, %v764
        %766 = vset.pattern.permute.xlu0 16
        %767 = vperm.xlu0 %766, %v214
        %v768 = vpop.permute.xlu0 %767
        %v770 = vadd.f32 %v765, %v768
        %v771 = vmax.f32 %v770, 0.0
        %772 = vst [vmem:[%s206] sm:$0xff] %v771
        %p773 = scmp.lt.s32.totalorder %s14, 3
        %s774 = scalar_select %p773, %s14, 3
        %s775 = smul.addr %s774, 8
        %s776 = scalar_lea.vmem %s3, %s775
        // Predicated region
        $region71: #{forward.1} parent=65 // pred_check
          %p777 = pneg %p100
        $region72: #{forward.1} parent=65 // pred_check_branch
          %779 = sbr.rel (%p777) target = $region74
        $region73: #{forward.1} parent=65 // pred_region
          _
        $region74: #{forward.1} parent=65 // pred_fallthru
          _
      $region66: #{forward.1} parent=5 // pred_fallthru
        _
      %p780 = scmp.le.s32.totalorder 2, %s9
      // Predicated region
      $region75: #{forward.1} parent=5 // pred_check
        %p781 = pneg %p780
      $region76: #{forward.1} parent=5 // pred_check_branch
        %783 = sbr.rel (%p781) target = $region78
      $region77: #{forward.1} parent=5 // pred_region
        %s784 = ssub.s32 %s9, 2
        // Predicated region
        $region79: #{forward.1} parent=77 // pred_check
          %p785 = pneg %p106
        $region80: #{forward.1} parent=77 // pred_check_branch
          %787 = sbr.rel (%p785) target = $region82
        $region81: #{forward.1} parent=77 // pred_region
          %p788 = scmp.lt.s32.totalorder %s15, 3
          %s789 = scalar_select %p788, %s15, 3
          %s790 = smul.addr %s789, 8
          %s791 = scalar_lea.vmem %s3, %s790
        $region82: #{forward.1} parent=77 // pred_fallthru
          _
      $region78: #{forward.1} parent=5 // pred_fallthru
        _
    $region6: #{forward.1} parent=1 // loop_footer
      %s13 = sadd.s32 1, %s9
    $region7: #{forward.1} parent=1 // loop_footer_branch
      %8 = sbr.rel target = $region3
    $region8: #{forward.1} parent=1 // loop_exit
      _

</llo_original>
